<compile_context>
chip_gen: v7x
topology: tpu7x:2x2x1
jax: 0.10.0
libtpu: 0.0.40
codegen_flags: <defaults>
</compile_context>

<pallas_src>
import jax
import jax.numpy as jnp
from jax.experimental import pallas as pl
from jax.experimental.pallas import tpu as pltpu


def _align(n, m):
    return -(-n // m) * m


def make_layout(PM, H, M):
    """Single source of truth for packed-slab row/lane offsets (sublane- and
    lane-aligned) and the packed-output lane layout."""
    H2 = H // 2
    M2 = 2 * M
    G = 4 * H
    # LSTM slab: [w_ih (PM rows) | w_hh (H rows) | bias (1 row)], 8-row aligned.
    r_whh = _align(PM, 8)
    r_bias = r_whh + _align(H, 8)
    lstm_rows = _align(r_bias + 1, 8)
    lstm_w = _align(G, 128)
    # MLP slab: [w1 | b1 | w2 | b2 | w3 | b3], every segment start 8-row aligned,
    # width padded to a multiple of 128 lanes.
    r_b1 = _align(H, 8)
    r_w2 = r_b1 + 8
    r_b2 = r_w2 + _align(H2, 8)
    r_w3 = r_b2 + 8
    r_b3 = r_w3 + _align(M2, 8)
    mlp_rows = r_b3 + 8
    mlp_w = _align(max(H2, M2, M), 128)
    # Packed output row: lanes [0:M)=msg, [M:M+H)=h1, [M+H:M+2H)=c1, rest pad.
    out_w = _align(M + 2 * H, 128)
    return dict(r_whh=r_whh, r_bias=r_bias, lstm_rows=lstm_rows, lstm_w=lstm_w,
                r_b1=r_b1, r_w2=r_w2, r_b2=r_b2, r_w3=r_w3, r_b3=r_b3,
                mlp_rows=mlp_rows, mlp_w=mlp_w, out_w=out_w)


def make_communicator_kernel(PM, H, M, lay):
    """Fused kernel: one LSTM-cell step + 3-layer MLP head, per grid step t.
    h/c are carried across grid steps in VMEM scratch."""
    H2 = H // 2
    M2 = 2 * M
    G = 4 * H
    r_whh, r_bias = lay["r_whh"], lay["r_bias"]
    r_b1, r_w2, r_b2, r_w3, r_b3 = (lay["r_b1"], lay["r_w2"], lay["r_b2"],
                                    lay["r_w3"], lay["r_b3"])
    pad = lay["out_w"] - (M + 2 * H)

    def sigmoid(z):
        # exact logistic via tanh; tanh executes on the EUP slot, keeping the
        # dependent gate chain off the VALU (no vdiv).
        return 0.5 * (jnp.tanh(0.5 * z) + 1.0)

    def kernel(x_ref, h0_ref, c0_ref, lstm_ref, mlp_ref, out_ref, h_sc, c_sc):
        t = pl.program_id(0)

        @pl.when(t == 0)
        def _():
            h_sc[...] = h0_ref[...]
            c_sc[...] = c0_ref[...]

        x = x_ref[...]          # (B, PM)
        h = h_sc[...]           # (B, H)  carried state
        c = c_sc[...]           # (B, H)

        # ---- single LSTM cell step (PyTorch gate order: i, f, g, o) ----
        w_ih = lstm_ref[0:PM, 0:G]                  # (PM, 4H)
        w_hh = lstm_ref[r_whh:r_whh + H, 0:G]       # (H, 4H)
        b = lstm_ref[r_bias:r_bias + 1, 0:G]        # (1, 4H) = b_ih + b_hh
        gates = (jnp.dot(x, w_ih, preferred_element_type=jnp.float32)
                 + jnp.dot(h, w_hh, preferred_element_type=jnp.float32)
                 + b)
        i_g = sigmoid(gates[:, 0 * H:1 * H])
        f_g = sigmoid(gates[:, 1 * H:2 * H])
        g_g = jnp.tanh(gates[:, 2 * H:3 * H])
        o_g = sigmoid(gates[:, 3 * H:4 * H])
        c1 = f_g * c + i_g * g_g
        h1 = o_g * jnp.tanh(c1)
        h_sc[...] = h1
        c_sc[...] = c1

        # ---- get_message MLP: relu(fc1) -> relu(fc2) -> tanh(fc3) ----
        w1 = mlp_ref[0:H, 0:H2]
        b1 = mlp_ref[r_b1:r_b1 + 1, 0:H2]
        a1 = jnp.maximum(
            jnp.dot(h1, w1, preferred_element_type=jnp.float32) + b1, 0.0)

        w2 = mlp_ref[r_w2:r_w2 + H2, 0:M2]
        b2 = mlp_ref[r_b2:r_b2 + 1, 0:M2]
        a2 = jnp.maximum(
            jnp.dot(a1, w2, preferred_element_type=jnp.float32) + b2, 0.0)

        w3 = mlp_ref[r_w3:r_w3 + M2, 0:M]
        b3 = mlp_ref[r_b3:r_b3 + 1, 0:M]
        msg = jnp.tanh(
            jnp.dot(a2, w3, preferred_element_type=jnp.float32) + b3)

        # ---- single lane-dense packed output row: msg | h1 | c1 | pad ----
        pieces = [msg, h1, c1]
        if pad:
            pieces.append(jnp.zeros((msg.shape[0], pad), jnp.float32))
        out_ref[...] = jnp.concatenate(pieces, axis=-1)

    return kernel


def communicator_run(messages_seq, h0, c0, packed_params, *, M):
    """Run T fused (LSTM-cell + MLP) steps in ONE pallas_call.

    messages_seq: (T, B, P*M); h0, c0: (B, H).
    Returns (msgs (T, B, M), h_T (B, H), c_T (B, H)).
    Weight slabs are pinned to block 0 (staged to VMEM once); h/c are carried
    across grid steps in VMEM scratch, amortizing launch + weight DMA over T.
    """
    T, B, PM = messages_seq.shape
    H = h0.shape[-1]
    lay = make_layout(PM, H, M)
    lstm_slab, mlp_slab = packed_params
    kernel = make_communicator_kernel(PM, H, M, lay)

    out = pl.pallas_call(
        kernel,
        grid=(T,),
        in_specs=[
            pl.BlockSpec((None, B, PM), lambda t: (t, 0, 0)),   # messages[t]
            pl.BlockSpec((B, H), lambda t: (0, 0)),             # h0 (pinned)
            pl.BlockSpec((B, H), lambda t: (0, 0)),             # c0 (pinned)
            pl.BlockSpec(lstm_slab.shape, lambda t: (0, 0)),    # LSTM slab
            pl.BlockSpec(mlp_slab.shape, lambda t: (0, 0)),     # MLP slab
        ],
        out_specs=pl.BlockSpec((None, B, lay["out_w"]), lambda t: (t, 0, 0)),
        out_shape=jax.ShapeDtypeStruct((T, B, lay["out_w"]), jnp.float32),
        scratch_shapes=[pltpu.VMEM((B, H), jnp.float32),        # h carry
                        pltpu.VMEM((B, H), jnp.float32)],       # c carry
        compiler_params=pltpu.CompilerParams(
            dimension_semantics=("arbitrary",)),  # sequential carry over t
    )(messages_seq, h0, c0, lstm_slab, mlp_slab)

    msgs = out[:, :, 0:M]
    h_T = out[-1, :, M:M + H]
    c_T = out[-1, :, M + H:M + 2 * H]
    return msgs, h_T, c_T


def communicator_forward(messages, hc_t, packed_params, *, M):
    """Exact equivalent of the PyTorch Communicator.forward (one time step).

    messages: (B, P*M); hc_t = (h_t, c_t), each (1, B, H).
    Returns (message (1, B, M), (h_t1 (1, B, H), c_t1 (1, B, H))).
    """
    h_t, c_t = hc_t
    msgs, h1, c1 = communicator_run(
        messages[None], h_t[0], c_t[0], packed_params, M=M)
    return msgs, (h1[None], c1[None])
    # TODO(synk): if B grows into the thousands, add a row-tiled batch grid
    # axis marked "parallel" (exploits v7x's 2 TensorCores).


def init_raw_params(key, P, H, M):
    """Deterministic synthetic parameters with the same shapes as the PyTorch
    layers; weights stored transposed (in, out) for row-vector matmul."""
    PM = P * M
    H2 = H // 2
    M2 = 2 * M
    ks = jax.random.split(key, 10)
    s = 0.1
    return dict(
        w_ih_t=s * jax.random.normal(ks[0], (PM, 4 * H), jnp.float32),
        w_hh_t=s * jax.random.normal(ks[1], (H, 4 * H), jnp.float32),
        b_ih=s * jax.random.normal(ks[2], (4 * H,), jnp.float32),
        b_hh=s * jax.random.normal(ks[3], (4 * H,), jnp.float32),
        w1=s * jax.random.normal(ks[4], (H, H2), jnp.float32),
        b1=s * jax.random.normal(ks[5], (H2,), jnp.float32),
        w2=s * jax.random.normal(ks[6], (H2, M2), jnp.float32),
        b2=s * jax.random.normal(ks[7], (M2,), jnp.float32),
        w3=s * jax.random.normal(ks[8], (M2, M), jnp.float32),
        b3=s * jax.random.normal(ks[9], (M,), jnp.float32),
    )


def pack_params(raw):
    """One-time packing (amortized across calls): all LSTM params in one
    sublane/lane-aligned slab, all MLP params in one 128-lane-wide slab."""
    PM = raw["w_ih_t"].shape[0]
    H = raw["w_hh_t"].shape[0]
    M = raw["w3"].shape[1]
    H2 = H // 2
    M2 = 2 * M
    G = 4 * H
    lay = make_layout(PM, H, M)

    lstm = jnp.zeros((lay["lstm_rows"], lay["lstm_w"]), jnp.float32)
    lstm = lstm.at[0:PM, 0:G].set(raw["w_ih_t"])
    lstm = lstm.at[lay["r_whh"]:lay["r_whh"] + H, 0:G].set(raw["w_hh_t"])
    lstm = lstm.at[lay["r_bias"], 0:G].set(raw["b_ih"] + raw["b_hh"])

    mlp = jnp.zeros((lay["mlp_rows"], lay["mlp_w"]), jnp.float32)
    mlp = mlp.at[0:H, 0:H2].set(raw["w1"])
    mlp = mlp.at[lay["r_b1"], 0:H2].set(raw["b1"])
    mlp = mlp.at[lay["r_w2"]:lay["r_w2"] + H2, 0:M2].set(raw["w2"])
    mlp = mlp.at[lay["r_b2"], 0:M2].set(raw["b2"])
    mlp = mlp.at[lay["r_w3"]:lay["r_w3"] + M2, 0:M].set(raw["w3"])
    mlp = mlp.at[lay["r_b3"], 0:M].set(raw["b3"])
    return lstm, mlp


def reference_forward(messages, hc_t, raw):
    """Pure-JAX reference of the PyTorch Communicator.forward (one step)."""
    h, c = hc_t[0][0], hc_t[1][0]
    H = h.shape[-1]
    hi = jax.lax.Precision.HIGHEST
    gates = (jnp.dot(messages, raw["w_ih_t"], precision=hi)
             + jnp.dot(h, raw["w_hh_t"], precision=hi)
             + raw["b_ih"] + raw["b_hh"])

    def sig(z):
        return 1.0 / (1.0 + jnp.exp(-z))

    i_g = sig(gates[:, 0 * H:1 * H])
    f_g = sig(gates[:, 1 * H:2 * H])
    g_g = jnp.tanh(gates[:, 2 * H:3 * H])
    o_g = sig(gates[:, 3 * H:4 * H])
    c1 = f_g * c + i_g * g_g
    h1 = o_g * jnp.tanh(c1)
    a1 = jnp.maximum(jnp.dot(h1, raw["w1"], precision=hi) + raw["b1"], 0.0)
    a2 = jnp.maximum(jnp.dot(a1, raw["w2"], precision=hi) + raw["b2"], 0.0)
    msg = jnp.tanh(jnp.dot(a2, raw["w3"], precision=hi) + raw["b3"])
    return msg[None], (h1[None], c1[None])


if __name__ == "__main__":
    # Small shapes consistent with Communicator(P, H, M):
    # B=2, P=4, H=32, M=8  ->  LSTM input size P*M = 32, gate width 4H = 128.
    P, H, M, B = 4, 32, 8, 2

    key = jax.random.PRNGKey(0)
    k_msg, k_h, k_c, k_p, k_seq = jax.random.split(key, 5)
    messages = jax.random.normal(k_msg, (B, P * M), jnp.float32)
    h_t = jax.random.normal(k_h, (1, B, H), jnp.float32)
    c_t = jax.random.normal(k_c, (1, B, H), jnp.float32)

    raw = init_raw_params(k_p, P, H, M)
    packed = pack_params(raw)

    # ---- single step: exact PyTorch Communicator.forward semantics ----
    message, (h_t1, c_t1) = communicator_forward(
        messages, (h_t, c_t), packed, M=M)
    message, h_t1, c_t1 = jax.block_until_ready((message, h_t1, c_t1))

    assert message.shape == (1, B, M), message.shape
    assert h_t1.shape == (1, B, H) and c_t1.shape == (1, B, H)

    msg_exp, (h_exp, c_exp) = reference_forward(messages, (h_t, c_t), raw)
    assert bool(jnp.allclose(message, msg_exp, atol=1e-3, rtol=1e-3))
    assert bool(jnp.allclose(h_t1, h_exp, atol=1e-3, rtol=1e-3))
    assert bool(jnp.allclose(c_t1, c_exp, atol=1e-3, rtol=1e-3))

    # ---- fused multi-step run: amortizes launch + weight staging over T ----
    T = 8
    msg_seq = jax.random.normal(k_seq, (T, B, P * M), jnp.float32)
    msgs_k, hT_k, cT_k = jax.block_until_ready(
        communicator_run(msg_seq, h_t[0], c_t[0], packed, M=M))

    h_r, c_r = h_t, c_t
    ref_msgs = []
    for t in range(T):
        m_r, (h_r, c_r) = reference_forward(msg_seq[t], (h_r, c_r), raw)
        ref_msgs.append(m_r[0])
    ref_msgs = jnp.stack(ref_msgs)

    assert msgs_k.shape == (T, B, M)
    assert bool(jnp.allclose(msgs_k, ref_msgs, atol=2e-3, rtol=2e-3))
    assert bool(jnp.allclose(hT_k, h_r[0], atol=2e-3, rtol=2e-3))
    assert bool(jnp.allclose(cT_k, c_r[0], atol=2e-3, rtol=2e-3))

    print("KERNEL_OK")
</pallas_src>

<mosaic_0001>
module attributes {stable_mosaic.version = 11 : i64} {
  func.func @kernel(%arg0: i32, %arg1: memref<1x2x32xf32, #tpu.memory_space<vmem>>, %arg2: memref<2x32xf32, #tpu.memory_space<vmem>>, %arg3: memref<2x32xf32, #tpu.memory_space<vmem>>, %arg4: memref<72x128xf32, #tpu.memory_space<vmem>>, %arg5: memref<88x128xf32, #tpu.memory_space<vmem>>, %arg6: memref<1x2x128xf32, #tpu.memory_space<vmem>>, %arg7: memref<2x32xf32, #tpu.memory_space<vmem>>, %arg8: memref<2x32xf32, #tpu.memory_space<vmem>>) attributes {dimension_semantics = [#tpu.dimension_semantics<arbitrary>], iteration_bounds = array<i64: 1>, scalar_prefetch = 0 : i64, scratch_operands = 2 : i64, tpu.core_type = #tpu.core_type<tc>, window_params = [{transform_indices = @transform_0, window_bounds = array<i64: 1, 2, 32>}, {pipeline_mode = #tpu.pipeline_mode<synchronous>, transform_indices = @transform_1, window_bounds = array<i64: 2, 32>}, {pipeline_mode = #tpu.pipeline_mode<synchronous>, transform_indices = @transform_2, window_bounds = array<i64: 2, 32>}, {pipeline_mode = #tpu.pipeline_mode<synchronous>, transform_indices = @transform_3, window_bounds = array<i64: 72, 128>}, {pipeline_mode = #tpu.pipeline_mode<synchronous>, transform_indices = @transform_4, window_bounds = array<i64: 88, 128>}, {transform_indices = @transform_5, window_bounds = array<i64: 1, 2, 128>}]} {
    %c0_i32 = arith.constant 0 : i32
    %0 = arith.cmpi eq, %arg0, %c0_i32 : i32
    %1 = arith.extui %0 : i1 to i32
    %c0_i32_0 = arith.constant 0 : i32
    %2 = arith.cmpi ne, %1, %c0_i32_0 : i32
    scf.if %2 {
      %c0_43 = arith.constant 0 : index
      %c0_44 = arith.constant 0 : index
      %73 = vector.load %arg2[%c0_43, %c0_44] : memref<2x32xf32, #tpu.memory_space<vmem>>, vector<2x32xf32>
      %c0_45 = arith.constant 0 : index
      %c0_46 = arith.constant 0 : index
      %74 = vector.load %arg7[%c0_45, %c0_46] : memref<2x32xf32, #tpu.memory_space<vmem>>, vector<2x32xf32>
      tpu.vector_store %arg7[%c0_45, %c0_46], %73 {strides = array<i32>} : memref<2x32xf32, #tpu.memory_space<vmem>>, vector<2x32xf32>,
      %c0_47 = arith.constant 0 : index
      %c0_48 = arith.constant 0 : index
      %75 = vector.load %arg3[%c0_47, %c0_48] : memref<2x32xf32, #tpu.memory_space<vmem>>, vector<2x32xf32>
      %c0_49 = arith.constant 0 : index
      %c0_50 = arith.constant 0 : index
      %76 = vector.load %arg8[%c0_49, %c0_50] : memref<2x32xf32, #tpu.memory_space<vmem>>, vector<2x32xf32>
      tpu.vector_store %arg8[%c0_49, %c0_50], %75 {strides = array<i32>} : memref<2x32xf32, #tpu.memory_space<vmem>>, vector<2x32xf32>,
    } else {
    }
    %c0 = arith.constant 0 : index
    %c0_1 = arith.constant 0 : index
    %c0_2 = arith.constant 0 : index
    %3 = vector.load %arg1[%c0, %c0_1, %c0_2] : memref<1x2x32xf32, #tpu.memory_space<vmem>>, vector<1x2x32xf32>
    %4 = vector.shape_cast %3 : vector<1x2x32xf32> to vector<2x32xf32>
    %c0_3 = arith.constant 0 : index
    %c0_4 = arith.constant 0 : index
    %5 = vector.load %arg7[%c0_3, %c0_4] : memref<2x32xf32, #tpu.memory_space<vmem>>, vector<2x32xf32>
    %c0_5 = arith.constant 0 : index
    %c0_6 = arith.constant 0 : index
    %6 = vector.load %arg8[%c0_5, %c0_6] : memref<2x32xf32, #tpu.memory_space<vmem>>, vector<2x32xf32>
    %c0_7 = arith.constant 0 : index
    %c0_8 = arith.constant 0 : index
    %7 = vector.load %arg4[%c0_7, %c0_8] : memref<72x128xf32, #tpu.memory_space<vmem>>, vector<32x128xf32>
    %c32 = arith.constant 32 : index
    %c0_9 = arith.constant 0 : index
    %8 = vector.load %arg4[%c32, %c0_9] : memref<72x128xf32, #tpu.memory_space<vmem>>, vector<32x128xf32>
    %c64 = arith.constant 64 : index
    %c0_10 = arith.constant 0 : index
    %9 = vector.load %arg4[%c64, %c0_10] : memref<72x128xf32, #tpu.memory_space<vmem>>, vector<1x128xf32>
    %cst = arith.constant dense<0.000000e+00> : vector<2x128xf32>
    %10 = tpu.matmul %4, %7, %cst {dimension_numbers = #tpu.dot_dimension_numbers<[1], [0], [0], [1], [0, 0, 1, 1], [], []>} : vector<2x32xf32>, vector<32x128xf32>, vector<2x128xf32> -> vector<2x128xf32>
    %cst_11 = arith.constant dense<0.000000e+00> : vector<2x128xf32>
    %11 = tpu.matmul %5, %8, %cst_11 {dimension_numbers = #tpu.dot_dimension_numbers<[1], [0], [0], [1], [0, 0, 1, 1], [], []>} : vector<2x32xf32>, vector<32x128xf32>, vector<2x128xf32> -> vector<2x128xf32>
    %12 = arith.addf %10, %11 : vector<2x128xf32>
    %13 = vector.broadcast %9 : vector<1x128xf32> to vector<2x128xf32>
    %14 = arith.addf %12, %13 : vector<2x128xf32>
    %15 = vector.extract_strided_slice %14 {offsets = [0, 0], sizes = [2, 32], strides = [1, 1]} : vector<2x128xf32> to vector<2x32xf32>
    %cst_12 = arith.constant 5.000000e-01 : f32
    %16 = vector.broadcast %cst_12 : f32 to vector<2x32xf32>
    %17 = arith.mulf %16, %15 : vector<2x32xf32>
    %18 = math.tanh %17 : vector<2x32xf32>
    %cst_13 = arith.constant 1.000000e+00 : f32
    %19 = vector.broadcast %cst_13 : f32 to vector<2x32xf32>
    %20 = arith.addf %18, %19 : vector<2x32xf32>
    %cst_14 = arith.constant 5.000000e-01 : f32
    %21 = vector.broadcast %cst_14 : f32 to vector<2x32xf32>
    %22 = arith.mulf %21, %20 : vector<2x32xf32>
    %23 = vector.extract_strided_slice %14 {offsets = [0, 32], sizes = [2, 32], strides = [1, 1]} : vector<2x128xf32> to vector<2x32xf32>
    %cst_15 = arith.constant 5.000000e-01 : f32
    %24 = vector.broadcast %cst_15 : f32 to vector<2x32xf32>
    %25 = arith.mulf %24, %23 : vector<2x32xf32>
    %26 = math.tanh %25 : vector<2x32xf32>
    %cst_16 = arith.constant 1.000000e+00 : f32
    %27 = vector.broadcast %cst_16 : f32 to vector<2x32xf32>
    %28 = arith.addf %26, %27 : vector<2x32xf32>
    %cst_17 = arith.constant 5.000000e-01 : f32
    %29 = vector.broadcast %cst_17 : f32 to vector<2x32xf32>
    %30 = arith.mulf %29, %28 : vector<2x32xf32>
    %31 = vector.extract_strided_slice %14 {offsets = [0, 64], sizes = [2, 32], strides = [1, 1]} : vector<2x128xf32> to vector<2x32xf32>
    %32 = math.tanh %31 : vector<2x32xf32>
    %33 = vector.extract_strided_slice %14 {offsets = [0, 96], sizes = [2, 32], strides = [1, 1]} : vector<2x128xf32> to vector<2x32xf32>
    %cst_18 = arith.constant 5.000000e-01 : f32
    %34 = vector.broadcast %cst_18 : f32 to vector<2x32xf32>
    %35 = arith.mulf %34, %33 : vector<2x32xf32>
    %36 = math.tanh %35 : vector<2x32xf32>
    %cst_19 = arith.constant 1.000000e+00 : f32
    %37 = vector.broadcast %cst_19 : f32 to vector<2x32xf32>
    %38 = arith.addf %36, %37 : vector<2x32xf32>
    %cst_20 = arith.constant 5.000000e-01 : f32
    %39 = vector.broadcast %cst_20 : f32 to vector<2x32xf32>
    %40 = arith.mulf %39, %38 : vector<2x32xf32>
    %41 = arith.mulf %30, %6 : vector<2x32xf32>
    %42 = arith.mulf %22, %32 : vector<2x32xf32>
    %43 = arith.addf %41, %42 : vector<2x32xf32>
    %44 = math.tanh %43 : vector<2x32xf32>
    %45 = arith.mulf %40, %44 : vector<2x32xf32>
    %c0_21 = arith.constant 0 : index
    %c0_22 = arith.constant 0 : index
    %46 = vector.load %arg7[%c0_21, %c0_22] : memref<2x32xf32, #tpu.memory_space<vmem>>, vector<2x32xf32>
    tpu.vector_store %arg7[%c0_21, %c0_22], %45 {strides = array<i32>} : memref<2x32xf32, #tpu.memory_space<vmem>>, vector<2x32xf32>,
    %c0_23 = arith.constant 0 : index
    %c0_24 = arith.constant 0 : index
    %47 = vector.load %arg8[%c0_23, %c0_24] : memref<2x32xf32, #tpu.memory_space<vmem>>, vector<2x32xf32>
    tpu.vector_store %arg8[%c0_23, %c0_24], %43 {strides = array<i32>} : memref<2x32xf32, #tpu.memory_space<vmem>>, vector<2x32xf32>,
    %c0_25 = arith.constant 0 : index
    %c0_26 = arith.constant 0 : index
    %48 = vector.load %arg5[%c0_25, %c0_26] : memref<88x128xf32, #tpu.memory_space<vmem>>, vector<32x16xf32>
    %c32_27 = arith.constant 32 : index
    %c0_28 = arith.constant 0 : index
    %49 = vector.load %arg5[%c32_27, %c0_28] : memref<88x128xf32, #tpu.memory_space<vmem>>, vector<1x16xf32>
    %cst_29 = arith.constant dense<0.000000e+00> : vector<2x16xf32>
    %50 = tpu.matmul %45, %48, %cst_29 {dimension_numbers = #tpu.dot_dimension_numbers<[1], [0], [0], [1], [0, 0, 1, 1], [], []>} : vector<2x32xf32>, vector<32x16xf32>, vector<2x16xf32> -> vector<2x16xf32>
    %51 = vector.broadcast %49 : vector<1x16xf32> to vector<2x16xf32>
    %52 = arith.addf %50, %51 : vector<2x16xf32>
    %cst_30 = arith.constant 0.000000e+00 : f32
    %53 = vector.broadcast %cst_30 : f32 to vector<2x16xf32>
    %54 = arith.maximumf %52, %53 : vector<2x16xf32>
    %c40 = arith.constant 40 : index
    %c0_31 = arith.constant 0 : index
    %55 = vector.load %arg5[%c40, %c0_31] : memref<88x128xf32, #tpu.memory_space<vmem>>, vector<16x16xf32>
    %c56 = arith.constant 56 : index
    %c0_32 = arith.constant 0 : index
    %56 = vector.load %arg5[%c56, %c0_32] : memref<88x128xf32, #tpu.memory_space<vmem>>, vector<1x16xf32>
    %cst_33 = arith.constant dense<0.000000e+00> : vector<2x16xf32>
    %57 = tpu.matmul %54, %55, %cst_33 {dimension_numbers = #tpu.dot_dimension_numbers<[1], [0], [0], [1], [0, 0, 1, 1], [], []>} : vector<2x16xf32>, vector<16x16xf32>, vector<2x16xf32> -> vector<2x16xf32>
    %58 = vector.broadcast %56 : vector<1x16xf32> to vector<2x16xf32>
    %59 = arith.addf %57, %58 : vector<2x16xf32>
    %cst_34 = arith.constant 0.000000e+00 : f32
    %60 = vector.broadcast %cst_34 : f32 to vector<2x16xf32>
    %61 = arith.maximumf %59, %60 : vector<2x16xf32>
    %c64_35 = arith.constant 64 : index
    %c0_36 = arith.constant 0 : index
    %62 = vector.load %arg5[%c64_35, %c0_36] : memref<88x128xf32, #tpu.memory_space<vmem>>, vector<16x8xf32>
    %c80 = arith.constant 80 : index
    %c0_37 = arith.constant 0 : index
    %63 = vector.load %arg5[%c80, %c0_37] : memref<88x128xf32, #tpu.memory_space<vmem>>, vector<1x8xf32>
    %cst_38 = arith.constant dense<0.000000e+00> : vector<2x8xf32>
    %64 = tpu.matmul %61, %62, %cst_38 {dimension_numbers = #tpu.dot_dimension_numbers<[1], [0], [0], [1], [0, 0, 1, 1], [], []>} : vector<2x16xf32>, vector<16x8xf32>, vector<2x8xf32> -> vector<2x8xf32>
    %65 = vector.broadcast %63 : vector<1x8xf32> to vector<2x8xf32>
    %66 = arith.addf %64, %65 : vector<2x8xf32>
    %67 = math.tanh %66 : vector<2x8xf32>
    %cst_39 = arith.constant 0.000000e+00 : f32
    %68 = vector.broadcast %cst_39 : f32 to vector<2x56xf32>
    %69 = tpu.concatenate %67, %45, %43, %68 in 1 : vector<2x8xf32>, vector<2x32xf32>, vector<2x32xf32>, vector<2x56xf32> -> vector<2x128xf32>
    %c0_40 = arith.constant 0 : index
    %c0_41 = arith.constant 0 : index
    %c0_42 = arith.constant 0 : index
    %70 = vector.load %arg6[%c0_40, %c0_41, %c0_42] : memref<1x2x128xf32, #tpu.memory_space<vmem>>, vector<1x2x128xf32>
    %71 = vector.shape_cast %70 : vector<1x2x128xf32> to vector<2x128xf32>
    %72 = vector.shape_cast %69 : vector<2x128xf32> to vector<1x2x128xf32>
    tpu.vector_store %arg6[%c0_40, %c0_41, %c0_42], %72 {strides = array<i32>} : memref<1x2x128xf32, #tpu.memory_space<vmem>>, vector<1x2x128xf32>,
    return
  }
  func.func @transform_0(%arg0: i32) -> (i32, i32, i32) {
    %c0_i32 = arith.constant 0 : i32
    %c0_i32_0 = arith.constant 0 : i32
    %c0_i32_1 = arith.constant 0 : i32
    return %arg0, %c0_i32, %c0_i32_0 : i32, i32, i32
  }
  func.func @transform_1(%arg0: i32) -> (i32, i32) {
    %c0_i32 = arith.constant 0 : i32
    %c0_i32_0 = arith.constant 0 : i32
    %c0_i32_1 = arith.constant 0 : i32
    return %c0_i32, %c0_i32_0 : i32, i32
  }
  func.func @transform_2(%arg0: i32) -> (i32, i32) {
    %c0_i32 = arith.constant 0 : i32
    %c0_i32_0 = arith.constant 0 : i32
    %c0_i32_1 = arith.constant 0 : i32
    return %c0_i32, %c0_i32_0 : i32, i32
  }
  func.func @transform_3(%arg0: i32) -> (i32, i32) {
    %c0_i32 = arith.constant 0 : i32
    %c0_i32_0 = arith.constant 0 : i32
    %c0_i32_1 = arith.constant 0 : i32
    return %c0_i32, %c0_i32_0 : i32, i32
  }
  func.func @transform_4(%arg0: i32) -> (i32, i32) {
    %c0_i32 = arith.constant 0 : i32
    %c0_i32_0 = arith.constant 0 : i32
    %c0_i32_1 = arith.constant 0 : i32
    return %c0_i32, %c0_i32_0 : i32, i32
  }
  func.func @transform_5(%arg0: i32) -> (i32, i32, i32) {
    %c0_i32 = arith.constant 0 : i32
    %c0_i32_0 = arith.constant 0 : i32
    %c0_i32_1 = arith.constant 0 : i32
    return %arg0, %c0_i32, %c0_i32_0 : i32, i32, i32
  }
}

</mosaic_0001>

<llo_original>
// kernel: tpu_custom_call.1
$region0: #{tpu_custom_call.1}
  #allocation0 [shape = 'u32[]', space=smem, size = 0x4, offset = 0x4, fixed_abs, tag = 'smem constant byte address 0x4 - core index']
  #allocation1 [shape = 'u32[144,128]{1,0:T(1,128)}', space=vmem, size = 0x12000, scoped, tag = 'internal scratch']
  #allocation2 [shape = 'f32[2,32]{1,0:T(2,128)}', space=vmem, size = 0x400, scoped, tag = 'scratch operand']
  #allocation3 [shape = 'f32[2,32]{1,0:T(2,128)}', space=vmem, size = 0x400, scoped, tag = 'scratch operand']
  %s0 = inlined_call_operand.hbm [shape: f32[1,2,32], index: 0, kind: input, shape index: {}]
  %s1 = inlined_call_operand.vmem [shape: f32[2,32], index: 1, kind: input, shape index: {}]
  %s2 = inlined_call_operand.vmem [shape: f32[2,32], index: 2, kind: input, shape index: {}]
  %s3 = inlined_call_operand.hbm [shape: f32[72,128], index: 3, kind: input, shape index: {}]
  %s4 = inlined_call_operand.hbm [shape: f32[88,128], index: 4, kind: input, shape index: {}]
  %s5 = inlined_call_operand.hbm [shape: f32[1,2,128], index: 5, kind: output, shape index: {}]
  %s6 = sld [smem:[#allocation0]]
  $region46: #{tpu_custom_call.1} parent=0
    _
  %s8 = ssub.s32 1, %s6
  %s9 = scalar_select 0, %s8, %s6
  $region1: #{tpu_custom_call.1} parent=0
    #allocation4 [shape = 'u8[1024]{0}', space=vmem, size = 0x400, scoped, tag = 'input window, operand 0, single buffered']
    #allocation5 [shape = 's32[1]{0}', space=sflag, size = 0x4, scoped, tag = 'scoped memory for tpu_custom_call.1']
    #allocation6 [shape = 's32[1]{0}', space=sflag, size = 0x4, scoped, tag = 'scoped memory for tpu_custom_call.1']
    #allocation7 [shape = 'u8[36864]{0}', space=vmem, size = 0x9000, scoped, tag = 'input window, operand 3, single buffered']
    #allocation8 [shape = 's32[1]{0}', space=sflag, size = 0x4, scoped, tag = 'scoped memory for tpu_custom_call.1']
    #allocation9 [shape = 'u8[45056]{0}', space=vmem, size = 0xb000, scoped, tag = 'input window, operand 4, single buffered']
    #allocation10 [shape = 'u8[1024]{0}', space=vmem, size = 0x400, scoped, tag = 'output window, operand 0, single buffered']
    %10 = vsyncpa [#allocation5], 0
    %11 = vsyncpa [#allocation8], 0
    %12 = vsyncpa [#allocation6], 0
    // Predicated region
    $region2: #{tpu_custom_call.1} parent=1 // pred_check
      _
    $region3: #{tpu_custom_call.1} parent=1 // pred_check_branch
      %14 = sbr.rel (0) target = $region5
    $region4: #{tpu_custom_call.1} parent=1 // pred_region
      %s16 = ssub.s32 32, 32
      %17 = vsyncadd [#allocation5], %s16
      %s19 = sshll.u32 [#allocation4], 4
      %s20 = int_to_ptr.vmem [resolvable:$true] %s19
      %22 = dma.hbm_to_vmem [thread:$0]  %s0, 32, %s20, [#allocation5]
    $region5: #{tpu_custom_call.1} parent=1 // pred_fallthru
      _
    // Predicated region
    $region6: #{tpu_custom_call.1} parent=1 // pred_check
      _
    $region7: #{tpu_custom_call.1} parent=1 // pred_check_branch
      %24 = sbr.rel (0) target = $region9
    $region8: #{tpu_custom_call.1} parent=1 // pred_region
      _
    $region9: #{tpu_custom_call.1} parent=1 // pred_fallthru
      _
    // Predicated region
    $region10: #{tpu_custom_call.1} parent=1 // pred_check
      _
    $region11: #{tpu_custom_call.1} parent=1 // pred_check_branch
      %26 = sbr.rel (0) target = $region13
    $region12: #{tpu_custom_call.1} parent=1 // pred_region
      _
    $region13: #{tpu_custom_call.1} parent=1 // pred_fallthru
      _
    // Predicated region
    $region14: #{tpu_custom_call.1} parent=1 // pred_check
      _
    $region15: #{tpu_custom_call.1} parent=1 // pred_check_branch
      %28 = sbr.rel (0) target = $region17
    $region16: #{tpu_custom_call.1} parent=1 // pred_region
      %s30 = ssub.s32 1152, 1152
      %31 = vsyncadd [#allocation8], %s30
      %s32 = sshll.u32 [#allocation7], 4
      %s33 = int_to_ptr.vmem [resolvable:$true] %s32
      %38 = dma.hbm_to_vmem [thread:$0]  %s3, 1152, %s33, [#allocation8], 128, 128, 8
    $region17: #{tpu_custom_call.1} parent=1 // pred_fallthru
      _
    // Predicated region
    $region18: #{tpu_custom_call.1} parent=1 // pred_check
      _
    $region19: #{tpu_custom_call.1} parent=1 // pred_check_branch
      %40 = sbr.rel (0) target = $region21
    $region20: #{tpu_custom_call.1} parent=1 // pred_region
      %s42 = ssub.s32 1408, 1408
      %43 = vsyncadd [#allocation8], %s42
      %s44 = sshll.u32 [#allocation9], 4
      %s45 = int_to_ptr.vmem [resolvable:$true] %s44
      %50 = dma.hbm_to_vmem [thread:$0]  %s4, 1408, %s45, [#allocation8], 128, 128, 8
    $region21: #{tpu_custom_call.1} parent=1 // pred_fallthru
      _
    // Predicated region
    $region22: #{tpu_custom_call.1} parent=1 // pred_check
      _
    $region23: #{tpu_custom_call.1} parent=1 // pred_check_branch
      %52 = sbr.rel (0) target = $region25
    $region24: #{tpu_custom_call.1} parent=1 // pred_region
      %53 = dma.done [#allocation5], 32
    $region25: #{tpu_custom_call.1} parent=1 // pred_fallthru
      _
    // Predicated region
    $region26: #{tpu_custom_call.1} parent=1 // pred_check
      _
    $region27: #{tpu_custom_call.1} parent=1 // pred_check_branch
      %55 = sbr.rel (0) target = $region29
    $region28: #{tpu_custom_call.1} parent=1 // pred_region
      %56 = dma.done [#allocation8], 1152
    $region29: #{tpu_custom_call.1} parent=1 // pred_fallthru
      _
    // Predicated region
    $region30: #{tpu_custom_call.1} parent=1 // pred_check
      _
    $region31: #{tpu_custom_call.1} parent=1 // pred_check_branch
      %58 = sbr.rel (0) target = $region33
    $region32: #{tpu_custom_call.1} parent=1 // pred_region
      %59 = dma.done [#allocation8], 1408
    $region33: #{tpu_custom_call.1} parent=1 // pred_fallthru
      _
    %p60 = scmp.eq.s32.totalorder 0, 0
    // Predicated region
    $region34: #{tpu_custom_call.1} parent=1 // pred_check
      %p61 = pneg %p60
    $region35: #{tpu_custom_call.1} parent=1 // pred_check_branch
      %63 = sbr.rel (%p61) target = $region37
    $region36: #{tpu_custom_call.1} parent=1 // pred_region
      %v64 = vld [vmem:[%s1] sm:$0x3]
      %vm65 = vcmask 254976
      %66 = vst.msk [vmem:[#allocation2] sm:$0x3] %vm65, %v64
      %v67 = vld [vmem:[%s2] sm:$0x3]
      %68 = vst.msk [vmem:[#allocation3] sm:$0x3] %vm65, %v67
    $region37: #{tpu_custom_call.1} parent=1 // pred_fallthru
      _
    %v69 = vld [vmem:[#allocation4] sm:$0x3]
    %v70 = vld [vmem:[#allocation2] sm:$0x3]
    %v71 = vld [vmem:[#allocation3] sm:$0x3]
    %v72 = vld [vmem:[#allocation7] sm:$0xff]
    %v73 = vld [vmem:[#allocation7 + $0x8] sm:$0xff]
    %v74 = vld [vmem:[#allocation7 + $0x10] sm:$0xff]
    %v75 = vld [vmem:[#allocation7 + $0x18] sm:$0xff]
    %v76 = vld [vmem:[#allocation7 + $0x20] sm:$0xff]
    %v77 = vld [vmem:[#allocation7 + $0x28] sm:$0xff]
    %v78 = vld [vmem:[#allocation7 + $0x30] sm:$0xff]
    %v79 = vld [vmem:[#allocation7 + $0x38] sm:$0xff]
    %v80 = vld [vmem:[#allocation7 + $0x40] sm:$0x1]
    %vm81 = vcmask 261120
    %v83 = vsel %vm81, %v70, 0
    %85 = vmatprep.subr.mxu0 0.0
    %86 = vmatpush1.msra.mxu0 %v76
    %87 = vmatprep.subr.mxu0 0.0
    %88 = vmatpush1.msra.mxu0 %v77
    %89 = vmatprep.subr.mxu0 0.0
    %90 = vmatpush1.msra.mxu0 %v78
    %91 = vmatprep.subr.mxu0 0.0
    %92 = vmatpush1.msra.mxu0 %v79
    %93 = vmatprep.subr.mxu0 0.0
    %94 = vmatpush1.msra.mxu0 0.0
    %95 = vmatprep.subr.mxu0 0.0
    %96 = vmatpush1.msra.mxu0 0.0
    %97 = vmatprep.subr.mxu0 0.0
    %98 = vmatpush1.msra.mxu0 0.0
    %99 = vmatprep.subr.mxu0 0.0
    %100 = vmatpush1.msra.mxu0 0.0
    %101 = vmatprep.subr.mxu0 0.0
    %102 = vmatpush1.msra.mxu0 0.0
    %103 = vmatprep.subr.mxu0 0.0
    %104 = vmatpush1.msra.mxu0 0.0
    %105 = vmatprep.subr.mxu0 0.0
    %106 = vmatpush1.msra.mxu0 0.0
    %107 = vmatprep.subr.mxu0 0.0
    %108 = vmatpush1.msra.mxu0 0.0
    %109 = vmatprep.subr.mxu0 0.0
    %110 = vmatpush1.msra.mxu0 0.0
    %111 = vmatprep.subr.mxu0 0.0
    %112 = vmatpush1.msra.mxu0 0.0
    %113 = vmatprep.subr.mxu0 0.0
    %114 = vmatpush1.msra.mxu0 0.0
    %115 = vmatprep.subr.mxu0 0.0
    %116 = vmatpush1.msra.mxu0 0.0
    %117 = vmatprep.subr.mxu0 0.0
    %118 = vmatpush1.msra.mxu0 0.0
    %119 = vmatprep.subr.mxu0 0.0
    %120 = vmatpush1.msra.mxu0 0.0
    %121 = vmatprep.subr.mxu0 0.0
    %122 = vmatpush1.msra.mxu0 0.0
    %123 = vmatprep.subr.mxu0 0.0
    %124 = vmatpush1.msra.mxu0 0.0
    %125 = vmatprep.subr.mxu0 0.0
    %126 = vmatpush1.msra.mxu0 0.0
    %127 = vmatprep.subr.mxu0 0.0
    %128 = vmatpush1.msra.mxu0 0.0
    %129 = vmatprep.subr.mxu0 0.0
    %130 = vmatpush1.msra.mxu0 0.0
    %131 = vmatprep.subr.mxu0 0.0
    %132 = vmatpush1.msra.mxu0 0.0
    %133 = vmatprep.subr.mxu0 0.0
    %134 = vmatpush1.msra.mxu0 0.0
    %135 = vmatprep.subr.mxu0 0.0
    %136 = vmatpush1.msra.mxu0 0.0
    %137 = vmatprep.subr.mxu0 0.0
    %138 = vmatpush1.msra.mxu0 0.0
    %139 = vmatprep.subr.mxu0 0.0
    %140 = vmatpush1.msra.mxu0 0.0
    %141 = vmatprep.subr.mxu0 0.0
    %142 = vmatpush1.msra.mxu0 0.0
    %143 = vmatprep.subr.mxu0 0.0
    %144 = vmatpush1.msra.mxu0 0.0
    %145 = vmatprep.subr.mxu0 0.0
    %146 = vmatpush1.msra.mxu0 0.0
    %147 = vmatprep.subr.mxu0 0.0
    %148 = vmatpush1.msra.mxu0 0.0
    %149 = vmatprep.mubr.f32.mxu0 0.0
    %150 = vmatmul.mubr.f32.gmra.mrb[0].mxu0 %v83
    %v151 = vpop.f32.mrb[0].mxu0
    %v152 = vadd.f32 0.0, %v151
    %v153 = vpop.f32.mrb[0].mxu0
    %154 = vdwg.mxu0
    %v156 = vsel %vm81, %v69, 0
    %158 = vmatprep.subr.mxu0 0.0
    %159 = vmatpush1.msra.mxu0 %v72
    %160 = vmatprep.subr.mxu0 0.0
    %161 = vmatpush1.msra.mxu0 %v73
    %162 = vmatprep.subr.mxu0 0.0
    %163 = vmatpush1.msra.mxu0 %v74
    %164 = vmatprep.subr.mxu0 0.0
    %165 = vmatpush1.msra.mxu0 %v75
    %166 = vmatprep.subr.mxu0 0.0
    %167 = vmatpush1.msra.mxu0 0.0
    %168 = vmatprep.subr.mxu0 0.0
    %169 = vmatpush1.msra.mxu0 0.0
    %170 = vmatprep.subr.mxu0 0.0
    %171 = vmatpush1.msra.mxu0 0.0
    %172 = vmatprep.subr.mxu0 0.0
    %173 = vmatpush1.msra.mxu0 0.0
    %174 = vmatprep.subr.mxu0 0.0
    %175 = vmatpush1.msra.mxu0 0.0
    %176 = vmatprep.subr.mxu0 0.0
    %177 = vmatpush1.msra.mxu0 0.0
    %178 = vmatprep.subr.mxu0 0.0
    %179 = vmatpush1.msra.mxu0 0.0
    %180 = vmatprep.subr.mxu0 0.0
    %181 = vmatpush1.msra.mxu0 0.0
    %182 = vmatprep.subr.mxu0 0.0
    %183 = vmatpush1.msra.mxu0 0.0
    %184 = vmatprep.subr.mxu0 0.0
    %185 = vmatpush1.msra.mxu0 0.0
    %186 = vmatprep.subr.mxu0 0.0
    %187 = vmatpush1.msra.mxu0 0.0
    %188 = vmatprep.subr.mxu0 0.0
    %189 = vmatpush1.msra.mxu0 0.0
    %190 = vmatprep.subr.mxu0 0.0
    %191 = vmatpush1.msra.mxu0 0.0
    %192 = vmatprep.subr.mxu0 0.0
    %193 = vmatpush1.msra.mxu0 0.0
    %194 = vmatprep.subr.mxu0 0.0
    %195 = vmatpush1.msra.mxu0 0.0
    %196 = vmatprep.subr.mxu0 0.0
    %197 = vmatpush1.msra.mxu0 0.0
    %198 = vmatprep.subr.mxu0 0.0
    %199 = vmatpush1.msra.mxu0 0.0
    %200 = vmatprep.subr.mxu0 0.0
    %201 = vmatpush1.msra.mxu0 0.0
    %202 = vmatprep.subr.mxu0 0.0
    %203 = vmatpush1.msra.mxu0 0.0
    %204 = vmatprep.subr.mxu0 0.0
    %205 = vmatpush1.msra.mxu0 0.0
    %206 = vmatprep.subr.mxu0 0.0
    %207 = vmatpush1.msra.mxu0 0.0
    %208 = vmatprep.subr.mxu0 0.0
    %209 = vmatpush1.msra.mxu0 0.0
    %210 = vmatprep.subr.mxu0 0.0
    %211 = vmatpush1.msra.mxu0 0.0
    %212 = vmatprep.subr.mxu0 0.0
    %213 = vmatpush1.msra.mxu0 0.0
    %214 = vmatprep.subr.mxu0 0.0
    %215 = vmatpush1.msra.mxu0 0.0
    %216 = vmatprep.subr.mxu0 0.0
    %217 = vmatpush1.msra.mxu0 0.0
    %218 = vmatprep.subr.mxu0 0.0
    %219 = vmatpush1.msra.mxu0 0.0
    %220 = vmatprep.subr.mxu0 0.0
    %221 = vmatpush1.msra.mxu0 0.0
    %222 = vmatprep.mubr.f32.mxu0 0.0
    %223 = vmatmul.mubr.f32.gmra.mrb[0].mxu0 %v156
    %v224 = vpop.f32.mrb[0].mxu0
    %v225 = vadd.f32 %v152, %v224
    %v226 = vpop.f32.mrb[0].mxu0
    %227 = vdwg.mxu0
    %v228 = vlaneseq
    %v229 = vshrl.u32 %v228, 7
    %v230 = vsub.s32 0, %v229
    %v231 = vrot.slane %v80, %v230
    %v232 = vadd.f32 %v225, %v231
    %v233 = vmul.f32 %v232, 0.5
    %v234 = vtanh.pop %v233
    %v235 = vadd.f32 %v234, 1.0
    %v236 = vmul.f32 %v235, 0.5
    %v237 = vtanh.pop %v232
    %239 = vrot.lane.b32.xlu0 %v71, 32
    %v240 = vpop.permute.xlu0 %239
    %v242 = vmul.f32 %v236, %v240
    %244 = vrot.lane.b32.xlu0 %v237, 64
    %v245 = vpop.permute.xlu0 %244
    %v247 = vmul.f32 %v236, %v245
    %249 = vrot.lane.b32.xlu0 %v247, 32
    %v250 = vpop.permute.xlu0 %249
    %v252 = vadd.f32 %v242, %v250
    %v253 = vtanh.pop %v252
    %255 = vrot.lane.b32.xlu0 %v253, 64
    %v256 = vpop.permute.xlu0 %255
    %v258 = vmul.f32 %v236, %v256
    %260 = vrot.lane.b32.xlu0 %v258, 32
    %v261 = vpop.permute.xlu0 %260
    %vm263 = vcmask 254976
    %264 = vst.msk [vmem:[#allocation2] sm:$0x3] %vm263, %v261
    %266 = vrot.lane.b32.xlu0 %v252, 96
    %v267 = vpop.permute.xlu0 %266
    %269 = vst.msk [vmem:[#allocation3] sm:$0x3] %vm263, %v267
    %v270 = vld [vmem:[#allocation9] sm:$0xff]
    %v271 = vld [vmem:[#allocation9 + $0x8] sm:$0xff]
    %v272 = vld [vmem:[#allocation9 + $0x10] sm:$0xff]
    %v273 = vld [vmem:[#allocation9 + $0x18] sm:$0xff]
    %v274 = vld [vmem:[#allocation9 + $0x20] sm:$0x1]
    %v275 = vlaneseq
    %v276 = vshrl.u32 %v275, 7
    %v277 = vsub.s32 0, %v276
    %v278 = vrot.slane %v274, %v277
    %v279 = vsel %vm81, %v261, 0
    %281 = vmatprep.subr.mxu0 0.0
    %282 = vmatpush1.msra.mxu0 %v270
    %283 = vmatprep.subr.mxu0 0.0
    %284 = vmatpush1.msra.mxu0 %v271
    %285 = vmatprep.subr.mxu0 0.0
    %286 = vmatpush1.msra.mxu0 %v272
    %287 = vmatprep.subr.mxu0 0.0
    %288 = vmatpush1.msra.mxu0 %v273
    %289 = vmatprep.subr.mxu0 0.0
    %290 = vmatpush1.msra.mxu0 0.0
    %291 = vmatprep.subr.mxu0 0.0
    %292 = vmatpush1.msra.mxu0 0.0
    %293 = vmatprep.subr.mxu0 0.0
    %294 = vmatpush1.msra.mxu0 0.0
    %295 = vmatprep.subr.mxu0 0.0
    %296 = vmatpush1.msra.mxu0 0.0
    %297 = vmatprep.subr.mxu0 0.0
    %298 = vmatpush1.msra.mxu0 0.0
    %299 = vmatprep.subr.mxu0 0.0
    %300 = vmatpush1.msra.mxu0 0.0
    %301 = vmatprep.subr.mxu0 0.0
    %302 = vmatpush1.msra.mxu0 0.0
    %303 = vmatprep.subr.mxu0 0.0
    %304 = vmatpush1.msra.mxu0 0.0
    %305 = vmatprep.subr.mxu0 0.0
    %306 = vmatpush1.msra.mxu0 0.0
    %307 = vmatprep.subr.mxu0 0.0
    %308 = vmatpush1.msra.mxu0 0.0
    %309 = vmatprep.subr.mxu0 0.0
    %310 = vmatpush1.msra.mxu0 0.0
    %311 = vmatprep.subr.mxu0 0.0
    %312 = vmatpush1.msra.mxu0 0.0
    %313 = vmatprep.subr.mxu0 0.0
    %314 = vmatpush1.msra.mxu0 0.0
    %315 = vmatprep.subr.mxu0 0.0
    %316 = vmatpush1.msra.mxu0 0.0
    %317 = vmatprep.subr.mxu0 0.0
    %318 = vmatpush1.msra.mxu0 0.0
    %319 = vmatprep.subr.mxu0 0.0
    %320 = vmatpush1.msra.mxu0 0.0
    %321 = vmatprep.subr.mxu0 0.0
    %322 = vmatpush1.msra.mxu0 0.0
    %323 = vmatprep.subr.mxu0 0.0
    %324 = vmatpush1.msra.mxu0 0.0
    %325 = vmatprep.subr.mxu0 0.0
    %326 = vmatpush1.msra.mxu0 0.0
    %327 = vmatprep.subr.mxu0 0.0
    %328 = vmatpush1.msra.mxu0 0.0
    %329 = vmatprep.subr.mxu0 0.0
    %330 = vmatpush1.msra.mxu0 0.0
    %331 = vmatprep.subr.mxu0 0.0
    %332 = vmatpush1.msra.mxu0 0.0
    %333 = vmatprep.subr.mxu0 0.0
    %334 = vmatpush1.msra.mxu0 0.0
    %335 = vmatprep.subr.mxu0 0.0
    %336 = vmatpush1.msra.mxu0 0.0
    %337 = vmatprep.subr.mxu0 0.0
    %338 = vmatpush1.msra.mxu0 0.0
    %339 = vmatprep.subr.mxu0 0.0
    %340 = vmatpush1.msra.mxu0 0.0
    %341 = vmatprep.subr.mxu0 0.0
    %342 = vmatpush1.msra.mxu0 0.0
    %343 = vmatprep.subr.mxu0 0.0
    %344 = vmatpush1.msra.mxu0 0.0
    %345 = vmatprep.mubr.f32.mxu0 0.0
    %346 = vmatmul.mubr.f32.gmra.mrb[0].mxu0 %v279
    %v347 = vpop.f32.mrb[0].mxu0
    %v348 = vadd.f32 %v278, %v347
    %v349 = vpop.f32.mrb[0].mxu0
    %350 = vdwg.mxu0
    %v351 = vmax.f32 %v348, 0.0
    %v352 = vld [vmem:[#allocation9 + $0x28] sm:$0xff]
    %v353 = vld [vmem:[#allocation9 + $0x30] sm:$0xff]
    %v354 = vld [vmem:[#allocation9 + $0x38] sm:$0x1]
    %v355 = vlaneseq
    %v356 = vshrl.u32 %v355, 7
    %v357 = vsub.s32 0, %v356
    %v358 = vrot.slane %v354, %v357
    %vm359 = vcmask 130048
    %v361 = vsel %vm359, %v351, 0
    %363 = vmatprep.subr.mxu0 0.0
    %364 = vmatpush1.msra.mxu0 %v352
    %365 = vmatprep.subr.mxu0 0.0
    %366 = vmatpush1.msra.mxu0 %v353
    %367 = vmatprep.subr.mxu0 0.0
    %368 = vmatpush1.msra.mxu0 0.0
    %369 = vmatprep.subr.mxu0 0.0
    %370 = vmatpush1.msra.mxu0 0.0
    %371 = vmatprep.subr.mxu0 0.0
    %372 = vmatpush1.msra.mxu0 0.0
    %373 = vmatprep.subr.mxu0 0.0
    %374 = vmatpush1.msra.mxu0 0.0
    %375 = vmatprep.subr.mxu0 0.0
    %376 = vmatpush1.msra.mxu0 0.0
    %377 = vmatprep.subr.mxu0 0.0
    %378 = vmatpush1.msra.mxu0 0.0
    %379 = vmatprep.subr.mxu0 0.0
    %380 = vmatpush1.msra.mxu0 0.0
    %381 = vmatprep.subr.mxu0 0.0
    %382 = vmatpush1.msra.mxu0 0.0
    %383 = vmatprep.subr.mxu0 0.0
    %384 = vmatpush1.msra.mxu0 0.0
    %385 = vmatprep.subr.mxu0 0.0
    %386 = vmatpush1.msra.mxu0 0.0
    %387 = vmatprep.subr.mxu0 0.0
    %388 = vmatpush1.msra.mxu0 0.0
    %389 = vmatprep.subr.mxu0 0.0
    %390 = vmatpush1.msra.mxu0 0.0
    %391 = vmatprep.subr.mxu0 0.0
    %392 = vmatpush1.msra.mxu0 0.0
    %393 = vmatprep.subr.mxu0 0.0
    %394 = vmatpush1.msra.mxu0 0.0
    %395 = vmatprep.subr.mxu0 0.0
    %396 = vmatpush1.msra.mxu0 0.0
    %397 = vmatprep.subr.mxu0 0.0
    %398 = vmatpush1.msra.mxu0 0.0
    %399 = vmatprep.subr.mxu0 0.0
    %400 = vmatpush1.msra.mxu0 0.0
    %401 = vmatprep.subr.mxu0 0.0
    %402 = vmatpush1.msra.mxu0 0.0
    %403 = vmatprep.subr.mxu0 0.0
    %404 = vmatpush1.msra.mxu0 0.0
    %405 = vmatprep.subr.mxu0 0.0
    %406 = vmatpush1.msra.mxu0 0.0
    %407 = vmatprep.subr.mxu0 0.0
    %408 = vmatpush1.msra.mxu0 0.0
    %409 = vmatprep.subr.mxu0 0.0
    %410 = vmatpush1.msra.mxu0 0.0
    %411 = vmatprep.subr.mxu0 0.0
    %412 = vmatpush1.msra.mxu0 0.0
    %413 = vmatprep.subr.mxu0 0.0
    %414 = vmatpush1.msra.mxu0 0.0
    %415 = vmatprep.subr.mxu0 0.0
    %416 = vmatpush1.msra.mxu0 0.0
    %417 = vmatprep.subr.mxu0 0.0
    %418 = vmatpush1.msra.mxu0 0.0
    %419 = vmatprep.subr.mxu0 0.0
    %420 = vmatpush1.msra.mxu0 0.0
    %421 = vmatprep.subr.mxu0 0.0
    %422 = vmatpush1.msra.mxu0 0.0
    %423 = vmatprep.subr.mxu0 0.0
    %424 = vmatpush1.msra.mxu0 0.0
    %425 = vmatprep.subr.mxu0 0.0
    %426 = vmatpush1.msra.mxu0 0.0
    %427 = vmatprep.mubr.f32.mxu0 0.0
    %428 = vmatmul.mubr.f32.gmra.mrb[0].mxu0 %v361
    %v429 = vpop.f32.mrb[0].mxu0
    %v430 = vadd.f32 %v358, %v429
    %v431 = vpop.f32.mrb[0].mxu0
    %432 = vdwg.mxu0
    %v433 = vmax.f32 %v430, 0.0
    %v434 = vld [vmem:[#allocation9 + $0x40] sm:$0xff]
    %v435 = vld [vmem:[#allocation9 + $0x48] sm:$0xff]
    %v436 = vld [vmem:[#allocation9 + $0x50] sm:$0x1]
    %v437 = vlaneseq
    %v438 = vshrl.u32 %v437, 7
    %v439 = vsub.s32 0, %v438
    %v440 = vrot.slane %v436, %v439
    %v442 = vsel %vm359, %v433, 0
    %444 = vmatprep.subr.mxu0 0.0
    %445 = vmatpush1.msra.mxu0 %v434
    %446 = vmatprep.subr.mxu0 0.0
    %447 = vmatpush1.msra.mxu0 %v435
    %448 = vmatprep.subr.mxu0 0.0
    %449 = vmatpush1.msra.mxu0 0.0
    %450 = vmatprep.subr.mxu0 0.0
    %451 = vmatpush1.msra.mxu0 0.0
    %452 = vmatprep.subr.mxu0 0.0
    %453 = vmatpush1.msra.mxu0 0.0
    %454 = vmatprep.subr.mxu0 0.0
    %455 = vmatpush1.msra.mxu0 0.0
    %456 = vmatprep.subr.mxu0 0.0
    %457 = vmatpush1.msra.mxu0 0.0
    %458 = vmatprep.subr.mxu0 0.0
    %459 = vmatpush1.msra.mxu0 0.0
    %460 = vmatprep.subr.mxu0 0.0
    %461 = vmatpush1.msra.mxu0 0.0
    %462 = vmatprep.subr.mxu0 0.0
    %463 = vmatpush1.msra.mxu0 0.0
    %464 = vmatprep.subr.mxu0 0.0
    %465 = vmatpush1.msra.mxu0 0.0
    %466 = vmatprep.subr.mxu0 0.0
    %467 = vmatpush1.msra.mxu0 0.0
    %468 = vmatprep.subr.mxu0 0.0
    %469 = vmatpush1.msra.mxu0 0.0
    %470 = vmatprep.subr.mxu0 0.0
    %471 = vmatpush1.msra.mxu0 0.0
    %472 = vmatprep.subr.mxu0 0.0
    %473 = vmatpush1.msra.mxu0 0.0
    %474 = vmatprep.subr.mxu0 0.0
    %475 = vmatpush1.msra.mxu0 0.0
    %476 = vmatprep.subr.mxu0 0.0
    %477 = vmatpush1.msra.mxu0 0.0
    %478 = vmatprep.subr.mxu0 0.0
    %479 = vmatpush1.msra.mxu0 0.0
    %480 = vmatprep.subr.mxu0 0.0
    %481 = vmatpush1.msra.mxu0 0.0
    %482 = vmatprep.subr.mxu0 0.0
    %483 = vmatpush1.msra.mxu0 0.0
    %484 = vmatprep.subr.mxu0 0.0
    %485 = vmatpush1.msra.mxu0 0.0
    %486 = vmatprep.subr.mxu0 0.0
    %487 = vmatpush1.msra.mxu0 0.0
    %488 = vmatprep.subr.mxu0 0.0
    %489 = vmatpush1.msra.mxu0 0.0
    %490 = vmatprep.subr.mxu0 0.0
    %491 = vmatpush1.msra.mxu0 0.0
    %492 = vmatprep.subr.mxu0 0.0
    %493 = vmatpush1.msra.mxu0 0.0
    %494 = vmatprep.subr.mxu0 0.0
    %495 = vmatpush1.msra.mxu0 0.0
    %496 = vmatprep.subr.mxu0 0.0
    %497 = vmatpush1.msra.mxu0 0.0
    %498 = vmatprep.subr.mxu0 0.0
    %499 = vmatpush1.msra.mxu0 0.0
    %500 = vmatprep.subr.mxu0 0.0
    %501 = vmatpush1.msra.mxu0 0.0
    %502 = vmatprep.subr.mxu0 0.0
    %503 = vmatpush1.msra.mxu0 0.0
    %504 = vmatprep.subr.mxu0 0.0
    %505 = vmatpush1.msra.mxu0 0.0
    %506 = vmatprep.subr.mxu0 0.0
    %507 = vmatpush1.msra.mxu0 0.0
    %508 = vmatprep.mubr.f32.mxu0 0.0
    %509 = vmatmul.mubr.f32.gmra.mrb[0].mxu0 %v442
    %v510 = vpop.f32.mrb[0].mxu0
    %v511 = vadd.f32 %v440, %v510
    %v512 = vpop.f32.mrb[0].mxu0
    %513 = vdwg.mxu0
    %v514 = vtanh.pop %v511
    %515 = vrot.lane.b32.xlu0 %v258, 40
    %v516 = vpop.permute.xlu0 %515
    %518 = vrot.lane.b32.xlu0 %v252, 8
    %v519 = vpop.permute.xlu0 %518
    %vm521 = vcmask 64512
    %v522 = vsel %vm521, %v514, %v516
    %vm523 = vcmask 326656
    %v524 = vsel %vm523, %v522, %v519
    %vm525 = vcmask 588800
    %v526 = vsel %vm525, %v524, 0.0
    %527 = vst [vmem:[#allocation10] sm:$0x3] %v526
    // Predicated region
    $region38: #{tpu_custom_call.1} parent=1 // pred_check
      _
    $region39: #{tpu_custom_call.1} parent=1 // pred_check_branch
      %529 = sbr.rel (0) target = $region41
    $region40: #{tpu_custom_call.1} parent=1 // pred_region
      %s531 = ssub.s32 32, 32
      %532 = vsyncadd [#allocation6], %s531
      %s534 = sshll.u32 [#allocation10], 4
      %s535 = int_to_ptr.vmem [resolvable:$true] %s534
      %537 = dma.vmem_to_hbm [thread:$0]  %s535, 32, %s5, [#allocation6]
    $region41: #{tpu_custom_call.1} parent=1 // pred_fallthru
      _
    // Predicated region
    $region42: #{tpu_custom_call.1} parent=1 // pred_check
      _
    $region43: #{tpu_custom_call.1} parent=1 // pred_check_branch
      %539 = sbr.rel (0) target = $region45
    $region44: #{tpu_custom_call.1} parent=1 // pred_region
      %540 = dma.done [#allocation6], 32
    $region45: #{tpu_custom_call.1} parent=1 // pred_fallthru
      _
    %541 = vsyncpa [#allocation5], 1
    %542 = vsyncpa [#allocation8], 1
    %543 = vsyncpa [#allocation6], 1

</llo_original>
